<compile_context>
chip_gen: v7x
topology: tpu7x:2x2x1
jax: 0.10.0
libtpu: 0.0.40
codegen_flags: <defaults>
</compile_context>

<pallas_src>
import functools

import jax
import jax.numpy as jnp
from jax import lax
from jax.experimental import pallas as pl
from jax.experimental.pallas import tpu as pltpu


# ---------------------------------------------------------------------------
# Helpers
# ---------------------------------------------------------------------------
def _round_up(x, m):
    return ((x + m - 1) // m) * m


def _nbytes(a):
    return int(a.size) * a.dtype.itemsize


def _vmem_capacity_bytes():
    """Generation-aware VMEM capacity (v5e/v6e: 128 MiB, v7x: 64 MiB)."""
    try:
        cap = getattr(pltpu.get_tpu_info(), "vmem_capacity_bytes", None)
        if cap:
            return int(cap)
    except Exception:
        pass
    return 64 * 1024 * 1024   # conservative (v7x per-core)


def _default_score_dtype():
    """bf16 attention-score math only where the VPU/EUP are bf16-native (v6e / v7x)."""
    try:
        kind = jax.devices()[0].device_kind.lower()
    except Exception:
        return jnp.float32
    if ("v6" in kind) or ("v7" in kind):
        return jnp.bfloat16
    return jnp.float32


# ---------------------------------------------------------------------------
# Row-tiled Pallas linear (memory layer, wav-frame projection)
# ---------------------------------------------------------------------------
def _linear_kernel(x_ref, w_ref, b_ref, o_ref, *, relu):
    y = jnp.dot(x_ref[...], w_ref[...], preferred_element_type=jnp.float32) + b_ref[...]
    if relu:
        y = jnp.maximum(y, 0.0)
    o_ref[...] = y.astype(o_ref.dtype)


def pallas_linear(x, w_t, b=None, relu=False, out_dtype=jnp.float32, block_rows=1024):
    """x: (M, K) f32, w_t: (K, N) f32 (pre-transposed), b: (1, N) or None."""
    m, k = x.shape
    n = w_t.shape[1]
    if b is None:
        b = jnp.zeros((1, n), jnp.float32)
    b = b.reshape(1, n).astype(jnp.float32)
    bm = m if m <= block_rows else block_rows
    return pl.pallas_call(
        functools.partial(_linear_kernel, relu=relu),
        out_shape=jax.ShapeDtypeStruct((m, n), out_dtype),
        grid_spec=pltpu.PrefetchScalarGridSpec(
            num_scalar_prefetch=0, grid=(pl.cdiv(m, bm),),
            in_specs=[pl.BlockSpec((bm, k), lambda i: (i, 0)),
                      pl.BlockSpec((k, n), lambda i: (0, 0)),
                      pl.BlockSpec((1, n), lambda i: (0, 0))],
            out_specs=pl.BlockSpec((bm, n), lambda i: (i, 0))),
        compiler_params=pltpu.CompilerParams(dimension_semantics=("parallel",)),
    )(x, w_t, b)


# ---------------------------------------------------------------------------
# Fused front-end: prenet (2x ReLU linear) -> speaker_projection ∘ attention-LSTM x-projection
# (weights folded outside the kernel). Row-tiled, one matmul chain, no HBM intermediates.
# ---------------------------------------------------------------------------
def _prenet_frontend_kernel(di_ref, w1_ref, w2_ref, wsx_ref, bsx_ref, o_ref):
    h = jnp.maximum(jnp.dot(di_ref[...], w1_ref[...],
                            preferred_element_type=jnp.float32), 0.0)
    h = jnp.maximum(jnp.dot(h, w2_ref[...],
                            preferred_element_type=jnp.float32), 0.0)
    y = jnp.dot(h, wsx_ref[...], preferred_element_type=jnp.float32) + bsx_ref[...]
    o_ref[...] = y.astype(o_ref.dtype)


def prenet_frontend(di2d, w1, w2, wsx, bsx, out_dtype=jnp.bfloat16, block_rows=1024):
    m, mo = di2d.shape
    dp = w1.shape[1]
    n = wsx.shape[1]
    bm = m if m <= block_rows else block_rows
    return pl.pallas_call(
        _prenet_frontend_kernel,
        out_shape=jax.ShapeDtypeStruct((m, n), out_dtype),
        grid_spec=pltpu.PrefetchScalarGridSpec(
            num_scalar_prefetch=0, grid=(pl.cdiv(m, bm),),
            in_specs=[pl.BlockSpec((bm, mo), lambda i: (i, 0)),
                      pl.BlockSpec((mo, dp), lambda i: (0, 0)),
                      pl.BlockSpec((dp, dp), lambda i: (0, 0)),
                      pl.BlockSpec((dp, n), lambda i: (0, 0)),
                      pl.BlockSpec((1, n), lambda i: (0, 0))],
            out_specs=pl.BlockSpec((bm, n), lambda i: (i, 0))),
        compiler_params=pltpu.CompilerParams(dimension_semantics=("parallel",)),
    )(di2d, w1, w2, wsx, bsx)


# ---------------------------------------------------------------------------
# Sequential decoder kernel: grid=(batch_shards, T/Tc); Tc steps per grid iteration.
# Recurrent state lives in VMEM scratch; state slab layout is [h_att | ctx | h_dec].
# ---------------------------------------------------------------------------
def _decoder_step_kernel(
    gx_ref, mem_ref, pmem_ref, mask_ref,
    watt_ref, wq_ref, wv_ref, wc0_ref, wc1_ref,
    wdec_ref, bd_ref, wout_ref, bout_ref,
    out_ref, align_ref,
    state_s, attc_s, decc_s, awp_s, awcp_s,
    *, kernel_size, lpad, score_dtype, bcast_transpose):
    tc = gx_ref.shape[0]
    ra = attc_s.shape[1]
    rd = decc_s.shape[1]
    ed = state_s.shape[1] - ra - rd
    mtp = mask_ref.shape[1]
    pad = (kernel_size - 1) // 2
    sdt = score_dtype

    @pl.when(pl.program_id(1) == 0)
    def _init():   # initialize_decoder_states (per batch shard)
        state_s[...] = jnp.zeros_like(state_s)
        attc_s[...] = jnp.zeros_like(attc_s)
        decc_s[...] = jnp.zeros_like(decc_s)
        awp_s[...] = jnp.zeros_like(awp_s)
        awcp_s[...] = jnp.zeros_like(awcp_s)

    def step(i, carry):
        # ---- attention LSTM: gates = (x@W_ih_x + b, hoisted) + [h_att ; ctx] @ W_fused ----
        gates = gx_ref[i].astype(jnp.float32) + jnp.dot(
            state_s[:, :ra + ed], watt_ref[...], preferred_element_type=jnp.float32)
        c_a = attc_s[...]
        i_g = jax.nn.sigmoid(gates[:, 0 * ra:1 * ra])
        f_g = jax.nn.sigmoid(gates[:, 1 * ra:2 * ra])
        g_g = jnp.tanh(gates[:, 2 * ra:3 * ra])
        o_g = jax.nn.sigmoid(gates[:, 3 * ra:4 * ra])
        c_a_new = f_g * c_a + i_g * g_g
        h_a_new = o_g * jnp.tanh(c_a_new)
        # TODO(synk): F.dropout(p_attention_dropout, training) omitted (deterministic eval).

        # ---- location-sensitive attention (location_dense folded into the taps) ----
        pq = jnp.dot(h_a_new, wq_ref[...], preferred_element_type=jnp.float32)   # (B, A)
        acc = pq.astype(sdt)[:, None, :] + pmem_ref[...].astype(sdt)              # (B, MTp, A)
        if bcast_transpose:
            awp3 = jnp.swapaxes(awp_s[...].astype(sdt)[:, None, :], 1, 2)         # (B, W, 1)
            awcp3 = jnp.swapaxes(awcp_s[...].astype(sdt)[:, None, :], 1, 2)
        else:
            awp3 = awp_s[...].astype(sdt)[:, :, None]
            awcp3 = awcp_s[...].astype(sdt)[:, :, None]
        for k in range(kernel_size):        # K taps on the VPU; weights pre-folded with dense
            s0 = lpad - pad + k
            w0 = wc0_ref[k:k + 1, :][None, :, :].astype(sdt)                       # (1, 1, A)
            w1 = wc1_ref[k:k + 1, :][None, :, :].astype(sdt)
            acc = acc + awp3[:, s0:s0 + mtp, :] * w0
            acc = acc + awcp3[:, s0:s0 + mtp, :] * w1
        e_t = jnp.tanh(acc)
        wv3 = wv_ref[...][None, :, :].astype(sdt)                                  # (1, 1, A)
        energies = jnp.sum((e_t * wv3).astype(jnp.float32), axis=-1) + mask_ref[...]
        m = jnp.max(energies, axis=-1, keepdims=True)
        ex = jnp.exp(energies - m)
        aw_new = ex / jnp.sum(ex, axis=-1, keepdims=True)                          # (B, MTp) f32

        mem = mem_ref[...]                                                         # bf16
        ctx_new = jnp.einsum('bqm,bme->bqe',
                             aw_new[:, None, :].astype(mem.dtype), mem,
                             preferred_element_type=jnp.float32)[:, 0, :]          # (B, E) f32
        awc_new = awcp_s[:, lpad:lpad + mtp] + aw_new                              # f32 cum

        # ---- write back attention-side state (slab [h_att | ctx | h_dec]) ----
        state_s[:, :ra] = h_a_new
        state_s[:, ra:ra + ed] = ctx_new
        attc_s[...] = c_a_new
        awp_s[:, lpad:lpad + mtp] = aw_new          # interior of padded buffer (pad stays zero)
        awcp_s[:, lpad:lpad + mtp] = awc_new

        # ---- decoder LSTM over the full state slab (no concatenates) ----
        dgates = jnp.dot(state_s[...], wdec_ref[...],
                         preferred_element_type=jnp.float32) + bd_ref[...]
        c_d = decc_s[...]
        di_g = jax.nn.sigmoid(dgates[:, 0 * rd:1 * rd])
        df_g = jax.nn.sigmoid(dgates[:, 1 * rd:2 * rd])
        dg_g = jnp.tanh(dgates[:, 2 * rd:3 * rd])
        do_g = jax.nn.sigmoid(dgates[:, 3 * rd:4 * rd])
        c_d_new = df_g * c_d + di_g * dg_g
        h_d_new = do_g * jnp.tanh(c_d_new)
        decc_s[...] = c_d_new
        state_s[:, ra + ed:] = h_d_new
        # TODO(synk): F.dropout(p_decoder_dropout, training) omitted (deterministic eval).

        # ---- fused, lane-dense mel+gate projection on [ctx | h_dec] ----
        out = jnp.dot(state_s[:, ra:], wout_ref[...],
                      preferred_element_type=jnp.float32) + bout_ref[...]
        out_ref[i] = out
        align_ref[i] = aw_new
        return carry

    lax.fori_loop(0, tc, step, 0)


def run_decoder_loop(gx, memory, pmem, mask_add, p, *, num_shards=None,
                     steps_per_block=8, score_dtype=jnp.float32):
    T_steps, B, Ra4 = gx.shape
    _, MTp, E = memory.shape
    A = pmem.shape[-1]
    K = p['wc0A'].shape[0]
    pad = (K - 1) // 2
    LPAD = 128
    assert pad <= LPAD, "attention_location_kernel_size too large for the padded layout"
    W = LPAD + MTp + LPAD
    Ra = p['w_att_hc'].shape[1] // 4
    Rd = p['w_dec_all'].shape[1] // 4
    Mo1p = p['w_out_all'].shape[1]

    # Batch sharding across TensorCores (v7x megacore); only when shards stay sublane-friendly.
    if num_shards is None:
        num_shards = 2 if (B % 2 == 0 and (B // 2) % 16 == 0) else 1
    assert B % num_shards == 0
    Bs = B // num_shards

    # Tc decode steps per grid iteration (amortize per-step pipeline overhead).
    Tc = min(steps_per_block, T_steps)
    Tpad = _round_up(T_steps, Tc)
    if Tpad != T_steps:
        gx = jnp.pad(gx, ((0, Tpad - T_steps), (0, 0), (0, 0)))
    TT = Tpad // Tc

    weight_keys = ('w_att_hc', 'wq_t', 'wv', 'wc0A', 'wc1A',
                   'w_dec_all', 'bd', 'w_out_all', 'b_out')
    weights = [p[k] for k in weight_keys]

    out_shape = [jax.ShapeDtypeStruct((Tpad, B, Mo1p), jnp.float32),
                 jax.ShapeDtypeStruct((Tpad, B, MTp), jnp.float32)]
    out_specs = [pl.BlockSpec((Tc, Bs, Mo1p), lambda s, t: (t, s, 0)),
                 pl.BlockSpec((Tc, Bs, MTp), lambda s, t: (t, s, 0))]
    scratch = [pltpu.VMEM((Bs, Ra + E + Rd), jnp.float32),   # [h_att | ctx | h_dec]
               pltpu.VMEM((Bs, Ra), jnp.float32),            # attention_cell
               pltpu.VMEM((Bs, Rd), jnp.float32),            # decoder_cell
               pltpu.VMEM((Bs, W), jnp.float32),             # attention_weights (padded)
               pltpu.VMEM((Bs, W), jnp.float32)]             # attention_weights_cum (padded)

    cap = _vmem_capacity_bytes()
    inv_bytes = (Bs * MTp * E * memory.dtype.itemsize
                 + Bs * MTp * A * pmem.dtype.itemsize
                 + Bs * MTp * 4
                 + sum(_nbytes(w) for w in weights))
    stream_bytes = 2 * Bs * Tc * (Ra4 * gx.dtype.itemsize + (Mo1p + MTp) * 4)
    scratch_bytes = 4 * Bs * ((Ra + E + Rd) + Ra + Rd + 2 * W)
    temp_bytes = 4 * Bs * MTp * max(A, 128) * 4 + 2 * Bs * ((W + 7) // 8) * 4096

    def _specs(single_buffer):
        def const_spec(arr):
            nd = arr.ndim
            if single_buffer:
                return pl.BlockSpec(arr.shape, lambda s, t, nd=nd: (0,) * nd,
                                    pipeline_mode=pl.Buffered(1))
            return pl.BlockSpec(arr.shape, lambda s, t, nd=nd: (0,) * nd)

        def shard_spec(arr):
            nd = arr.ndim
            block = (Bs,) + tuple(arr.shape[1:])
            idx = lambda s, t, nd=nd: (s,) + (0,) * (nd - 1)
            if single_buffer:
                return pl.BlockSpec(block, idx, pipeline_mode=pl.Buffered(1))
            return pl.BlockSpec(block, idx)

        gx_spec = pl.BlockSpec((Tc, Bs, Ra4), lambda s, t: (t, s, 0))
        return ([gx_spec, shard_spec(memory), shard_spec(pmem), shard_spec(mask_add)]
                + [const_spec(w) for w in weights])

    def _attempt(single_buffer, bcast_transpose):
        need = ((1 if single_buffer else 2) * inv_bytes + stream_bytes
                + scratch_bytes + temp_bytes + (4 << 20))
        budget = int(min(cap - (8 << 20), max(32 << 20, need)))
        grid_spec = pltpu.PrefetchScalarGridSpec(
            num_scalar_prefetch=0, grid=(num_shards, TT),
            in_specs=_specs(single_buffer), out_specs=out_specs,
            scratch_shapes=scratch)
        kern = functools.partial(_decoder_step_kernel, kernel_size=K, lpad=LPAD,
                                 score_dtype=score_dtype, bcast_transpose=bcast_transpose)
        return pl.pallas_call(
            kern, out_shape=out_shape, grid_spec=grid_spec,
            compiler_params=pltpu.CompilerParams(
                dimension_semantics=("parallel", "arbitrary"),
                vmem_limit_bytes=budget),
        )(gx, memory, pmem, mask_add, *weights)

    # pipeline_mode=Buffered(1) and the (B, W, 1) relayout formulation are the two surfaces most
    # likely to vary across jax/Mosaic versions; fall back gracefully so the kernel always runs.
    configs = []
    if hasattr(pl, "Buffered"):
        configs += [(True, True), (True, False)]
    configs += [(False, True), (False, False)]

    last_err = None
    out = align = None
    for single_buffer, bcast_transpose in configs:
        try:
            out, align = _attempt(single_buffer, bcast_transpose)
            jax.block_until_ready((out, align))
            break
        except Exception as e:   # noqa: BLE001 - retry with a more conservative config
            last_err = e
    else:
        raise last_err

    return out[:T_steps], align[:T_steps]


# ---------------------------------------------------------------------------
# Parameter setup (deterministic, synthetic) with weight fusion done once here.
# ---------------------------------------------------------------------------
def init_params(key, hp):
    E = hp['encoder_embedding_dim']
    Ra = hp['attention_rnn_dim']
    Rd = hp['decoder_rnn_dim']
    Dp = hp['prenet_dim']
    A = hp['attention_dim']
    Fl = hp['attention_location_n_filters']
    K = hp['attention_location_kernel_size']
    Mo = hp['n_mel_channels'] * hp['n_frames_per_step']

    def nrm(k, shape, scale=0.1):
        return scale * jax.random.normal(k, shape, jnp.float32)

    ks = iter(jax.random.split(key, 32))
    p = {}
    # Prenet: two LinearNorm(bias=False) layers (stored pre-transposed: (in, out))
    p['prenet_w1_t'] = nrm(next(ks), (Mo, Dp))
    p['prenet_w2_t'] = nrm(next(ks), (Dp, Dp))
    # speaker_projection
    # TODO(synk): original module hard-codes LinearNorm(768, 512), shape-inconsistent with its own
    # attention_rnn(prenet_dim + E); sized Dp->Dp here so forward() is runnable.
    spk_w_t = nrm(next(ks), (Dp, Dp))
    spk_b = nrm(next(ks), (1, Dp))
    # attention_rnn LSTMCell: W_ih (4Ra, Dp+E), W_hh (4Ra, Ra), b = b_ih + b_hh
    w_ih_a = nrm(next(ks), (4 * Ra, Dp + E))
    wax_t = jnp.transpose(w_ih_a[:, :Dp])
    wac_t = jnp.transpose(w_ih_a[:, Dp:])
    wah_t = jnp.transpose(nrm(next(ks), (4 * Ra, Ra)))
    ba = (nrm(next(ks), (4 * Ra,)) + nrm(next(ks), (4 * Ra,))).reshape(1, 4 * Ra)
    # Fold speaker_projection ∘ attention-LSTM x-projection (+bias): applied OUTSIDE the loop.
    p['w_sx'] = jnp.dot(spk_w_t, wax_t)                               # (Dp, 4Ra)
    p['b_sx'] = jnp.dot(spk_b, wax_t) + ba                            # (1, 4Ra)
    # Recurrent part of the attention LSTM in slab order [h_att ; ctx]
    p['w_att_hc'] = jnp.concatenate([wah_t, wac_t], axis=0)           # (Ra+E, 4Ra)
    # Attention layer
    p['wq_t'] = jnp.transpose(nrm(next(ks), (A, Ra)))                 # query_layer (bias=False)
    p['wmem_t'] = jnp.transpose(nrm(next(ks), (A, E)))                # memory_layer (bias=False)
    p['wv'] = nrm(next(ks), (1, A))                                   # v (bias=False)
    w_conv = nrm(next(ks), (Fl, 2, K))                                # location_conv (bias=False)
    w_dense = nrm(next(ks), (A, Fl))                                  # location_dense (bias=False)
    # Fold location_dense into the conv taps: (K, Fl) @ (Fl, A) -> (K, A)
    p['wc0A'] = jnp.dot(jnp.transpose(w_conv[:, 0, :]), jnp.transpose(w_dense))
    p['wc1A'] = jnp.dot(jnp.transpose(w_conv[:, 1, :]), jnp.transpose(w_dense))
    # decoder_rnn LSTMCell, fused weight in slab order [h_att ; ctx ; h_dec]
    w_ih_d = nrm(next(ks), (4 * Rd, Ra + E))
    wdh_t = jnp.transpose(w_ih_d[:, :Ra])
    wdc_t = jnp.transpose(w_ih_d[:, Ra:])
    wdhh_t = jnp.transpose(nrm(next(ks), (4 * Rd, Rd)))
    p['w_dec_all'] = jnp.concatenate([wdh_t, wdc_t, wdhh_t], axis=0)  # (Ra+E+Rd, 4Rd)
    p['bd'] = (nrm(next(ks), (4 * Rd,)) + nrm(next(ks), (4 * Rd,))).reshape(1, 4 * Rd)
    # linear_projection + gate_layer fused into one lane-dense (padded to 128) output slab,
    # in slab order [ctx ; h_dec].
    w_proj = nrm(next(ks), (Mo, Rd + E))
    bp = nrm(next(ks), (1, Mo))
    w_gate = nrm(next(ks), (1, Rd + E))
    bg = nrm(next(ks), (1, 1))
    w_ctx = jnp.concatenate([jnp.transpose(w_proj[:, Rd:]), jnp.transpose(w_gate[:, Rd:])], axis=1)
    w_hd = jnp.concatenate([jnp.transpose(w_proj[:, :Rd]), jnp.transpose(w_gate[:, :Rd])], axis=1)
    w_out = jnp.concatenate([w_ctx, w_hd], axis=0)                    # (E+Rd, Mo+1)
    Mo1p = _round_up(Mo + 1, 128)
    p['w_out_all'] = jnp.pad(w_out, ((0, 0), (0, Mo1p - (Mo + 1))))
    p['b_out'] = jnp.pad(jnp.concatenate([bp, bg], axis=1), ((0, 0), (0, Mo1p - (Mo + 1))))
    return p


# ---------------------------------------------------------------------------
# Full forward (mirrors MultiSpeakerDecoder.forward)
# ---------------------------------------------------------------------------
def multi_speaker_decoder_forward(params, memory, decoder_inputs, memory_lengths, wavs, hp):
    B, MT, E = memory.shape
    n_mel = hp['n_mel_channels']
    nfps = hp['n_frames_per_step']
    Mo = n_mel * nfps
    Ra4 = params['w_sx'].shape[1]
    MTp = _round_up(MT, 128)

    # get_go_frame + parse_decoder_inputs
    go = jnp.zeros((1, B, Mo), jnp.float32)
    di = jnp.transpose(decoder_inputs, (0, 2, 1))                 # (B, T, n_mel)
    di = di.reshape(B, di.shape[1] // nfps, Mo)
    di = jnp.transpose(di, (1, 0, 2))                             # (T', B, Mo)
    di = jnp.concatenate([go, di], axis=0)                        # (T0, B, Mo)
    T0 = di.shape[0]
    Tw = wavs.shape[0]
    T_steps = T0 + Tw - 1    # while len(mel_outputs) < decoder_inputs.size(0) - 1

    # Fused front-end, hoisted out of the sequential loop; wav frames bypass the prenet.
    # Hoisted input stream stored in bf16.
    # TODO(synk): Prenet's always-on dropout(p=0.5) omitted for determinism.
    gx_pre = prenet_frontend(di.reshape(T0 * B, Mo),
                             params['prenet_w1_t'], params['prenet_w2_t'],
                             params['w_sx'], params['b_sx'], out_dtype=jnp.bfloat16)
    gx_wav = pallas_linear(wavs.reshape(Tw * B, -1), params['w_sx'], b=params['b_sx'],
                           out_dtype=jnp.bfloat16)
    gx = jnp.concatenate([gx_pre.reshape(T0, B, Ra4),
                          gx_wav.reshape(Tw, B, Ra4)], axis=0)[:T_steps]

    # Encoder memory / processed memory, zero-padded to lane-dense MTp and stored in bf16.
    mem_p = jnp.pad(memory, ((0, 0), (0, MTp - MT), (0, 0)))
    pmem = pallas_linear(mem_p.reshape(B * MTp, E), params['wmem_t']).reshape(B, MTp, -1)
    ids = jnp.arange(MTp, dtype=jnp.int32)[None, :]
    mask_add = jnp.where(ids < memory_lengths[:, None], 0.0, -1e30).astype(jnp.float32)

    out, align = run_decoder_loop(gx, mem_p.astype(jnp.bfloat16), pmem.astype(jnp.bfloat16),
                                  mask_add, params, score_dtype=_default_score_dtype())
    mel = out[..., :Mo]                  # (T, B, Mo)   (lane padding sliced off)
    gate = out[..., Mo]                  # (T, B)
    align = align[..., :MT]              # (T, B, MT)

    # parse_decoder_outputs
    mel_outputs = jnp.transpose(mel, (1, 0, 2)).reshape(B, -1, n_mel)
    mel_outputs = jnp.transpose(mel_outputs, (0, 2, 1))            # (B, n_mel, T*nfps)
    gate_outputs = jnp.transpose(gate, (1, 0))                     # (B, T)
    alignments = jnp.transpose(align, (1, 0, 2))                   # (B, T, MAX_TIME)
    return mel_outputs, gate_outputs, alignments


if __name__ == "__main__":
    key = jax.random.PRNGKey(0)
    hp = dict(
        n_mel_channels=4,
        n_frames_per_step=1,
        encoder_embedding_dim=16,
        attention_rnn_dim=32,
        decoder_rnn_dim=32,
        prenet_dim=16,
        attention_dim=16,
        attention_location_n_filters=4,
        attention_location_kernel_size=5,
    )
    B, MT, T_mel, T_wav = 2, 8, 6, 2
    k_mem, k_dec, k_wav, k_par = jax.random.split(key, 4)

    memory = jax.random.normal(k_mem, (B, MT, hp['encoder_embedding_dim']), jnp.float32)
    decoder_inputs = jax.random.normal(k_dec, (B, hp['n_mel_channels'], T_mel), jnp.float32)
    memory_lengths = jnp.array([8, 6], dtype=jnp.int32)
    wavs = jax.random.normal(k_wav, (T_wav, B, hp['prenet_dim']), jnp.float32)

    params = init_params(k_par, hp)

    mel_out, gate_out, align_out = multi_speaker_decoder_forward(
        params, memory, decoder_inputs, memory_lengths, wavs, hp)
    jax.block_until_ready((mel_out, gate_out, align_out))
    assert mel_out.shape == (B, hp['n_mel_channels'],
                             (T_mel + 1 + T_wav - 1) * hp['n_frames_per_step'])
    assert gate_out.shape == (B, T_mel + 1 + T_wav - 1)
    assert align_out.shape == (B, T_mel + 1 + T_wav - 1, MT)
    print("KERNEL_OK")
</pallas_src>

<mosaic_0001>
module attributes {stable_mosaic.version = 11 : i64} {
  func.func @_prenet_frontend_kernel(%arg0: i32, %arg1: memref<14x4xf32, #tpu.memory_space<vmem>>, %arg2: memref<4x16xf32, #tpu.memory_space<vmem>>, %arg3: memref<16x16xf32, #tpu.memory_space<vmem>>, %arg4: memref<16x128xf32, #tpu.memory_space<vmem>>, %arg5: memref<1x128xf32, #tpu.memory_space<vmem>>, %arg6: memref<14x128xbf16, #tpu.memory_space<vmem>>) attributes {dimension_semantics = [#tpu.dimension_semantics<parallel>], iteration_bounds = array<i64: 1>, scalar_prefetch = 0 : i64, scratch_operands = 0 : i64, tpu.core_type = #tpu.core_type<tc>, window_params = [{transform_indices = @transform_0, window_bounds = array<i64: 14, 4>}, {pipeline_mode = #tpu.pipeline_mode<synchronous>, transform_indices = @transform_1, window_bounds = array<i64: 4, 16>}, {pipeline_mode = #tpu.pipeline_mode<synchronous>, transform_indices = @transform_2, window_bounds = array<i64: 16, 16>}, {pipeline_mode = #tpu.pipeline_mode<synchronous>, transform_indices = @transform_3, window_bounds = array<i64: 16, 128>}, {pipeline_mode = #tpu.pipeline_mode<synchronous>, transform_indices = @transform_4, window_bounds = array<i64: 1, 128>}, {transform_indices = @transform_5, window_bounds = array<i64: 14, 128>}]} {
    %c0 = arith.constant 0 : index
    %c0_0 = arith.constant 0 : index
    %0 = vector.load %arg1[%c0, %c0_0] : memref<14x4xf32, #tpu.memory_space<vmem>>, vector<14x4xf32>
    %c0_1 = arith.constant 0 : index
    %c0_2 = arith.constant 0 : index
    %1 = vector.load %arg2[%c0_1, %c0_2] : memref<4x16xf32, #tpu.memory_space<vmem>>, vector<4x16xf32>
    %cst = arith.constant dense<0.000000e+00> : vector<14x16xf32>
    %2 = tpu.matmul %0, %1, %cst {dimension_numbers = #tpu.dot_dimension_numbers<[1], [0], [0], [1], [0, 0, 1, 1], [], []>} : vector<14x4xf32>, vector<4x16xf32>, vector<14x16xf32> -> vector<14x16xf32>
    %cst_3 = arith.constant 0.000000e+00 : f32
    %3 = vector.broadcast %cst_3 : f32 to vector<14x16xf32>
    %4 = arith.maximumf %2, %3 : vector<14x16xf32>
    %c0_4 = arith.constant 0 : index
    %c0_5 = arith.constant 0 : index
    %5 = vector.load %arg3[%c0_4, %c0_5] : memref<16x16xf32, #tpu.memory_space<vmem>>, vector<16x16xf32>
    %cst_6 = arith.constant dense<0.000000e+00> : vector<14x16xf32>
    %6 = tpu.matmul %4, %5, %cst_6 {dimension_numbers = #tpu.dot_dimension_numbers<[1], [0], [0], [1], [0, 0, 1, 1], [], []>} : vector<14x16xf32>, vector<16x16xf32>, vector<14x16xf32> -> vector<14x16xf32>
    %cst_7 = arith.constant 0.000000e+00 : f32
    %7 = vector.broadcast %cst_7 : f32 to vector<14x16xf32>
    %8 = arith.maximumf %6, %7 : vector<14x16xf32>
    %c0_8 = arith.constant 0 : index
    %c0_9 = arith.constant 0 : index
    %9 = vector.load %arg4[%c0_8, %c0_9] : memref<16x128xf32, #tpu.memory_space<vmem>>, vector<16x128xf32>
    %cst_10 = arith.constant dense<0.000000e+00> : vector<14x128xf32>
    %10 = tpu.matmul %8, %9, %cst_10 {dimension_numbers = #tpu.dot_dimension_numbers<[1], [0], [0], [1], [0, 0, 1, 1], [], []>} : vector<14x16xf32>, vector<16x128xf32>, vector<14x128xf32> -> vector<14x128xf32>
    %c0_11 = arith.constant 0 : index
    %c0_12 = arith.constant 0 : index
    %11 = vector.load %arg5[%c0_11, %c0_12] : memref<1x128xf32, #tpu.memory_space<vmem>>, vector<1x128xf32>
    %12 = vector.broadcast %11 : vector<1x128xf32> to vector<14x128xf32>
    %13 = arith.addf %10, %12 : vector<14x128xf32>
    %14 = arith.truncf %13 : vector<14x128xf32> to vector<14x128xbf16>
    %c0_13 = arith.constant 0 : index
    %c0_14 = arith.constant 0 : index
    %15 = vector.load %arg6[%c0_13, %c0_14] : memref<14x128xbf16, #tpu.memory_space<vmem>>, vector<14x128xbf16>
    tpu.vector_store %arg6[%c0_13, %c0_14], %14 {strides = array<i32>} : memref<14x128xbf16, #tpu.memory_space<vmem>>, vector<14x128xbf16>,
    return
  }
  func.func @transform_0(%arg0: i32) -> (i32, i32) {
    %c0_i32 = arith.constant 0 : i32
    %c0_i32_0 = arith.constant 0 : i32
    return %arg0, %c0_i32 : i32, i32
  }
  func.func @transform_1(%arg0: i32) -> (i32, i32) {
    %c0_i32 = arith.constant 0 : i32
    %c0_i32_0 = arith.constant 0 : i32
    %c0_i32_1 = arith.constant 0 : i32
    return %c0_i32, %c0_i32_0 : i32, i32
  }
  func.func @transform_2(%arg0: i32) -> (i32, i32) {
    %c0_i32 = arith.constant 0 : i32
    %c0_i32_0 = arith.constant 0 : i32
    %c0_i32_1 = arith.constant 0 : i32
    return %c0_i32, %c0_i32_0 : i32, i32
  }
  func.func @transform_3(%arg0: i32) -> (i32, i32) {
    %c0_i32 = arith.constant 0 : i32
    %c0_i32_0 = arith.constant 0 : i32
    %c0_i32_1 = arith.constant 0 : i32
    return %c0_i32, %c0_i32_0 : i32, i32
  }
  func.func @transform_4(%arg0: i32) -> (i32, i32) {
    %c0_i32 = arith.constant 0 : i32
    %c0_i32_0 = arith.constant 0 : i32
    %c0_i32_1 = arith.constant 0 : i32
    return %c0_i32, %c0_i32_0 : i32, i32
  }
  func.func @transform_5(%arg0: i32) -> (i32, i32) {
    %c0_i32 = arith.constant 0 : i32
    %c0_i32_0 = arith.constant 0 : i32
    return %arg0, %c0_i32 : i32, i32
  }
}

</mosaic_0001>

<llo_original>
// kernel: tpu_custom_call.1
$region0: #{tpu_custom_call.1}
  #allocation0 [shape = 'u32[]', space=smem, size = 0x4, offset = 0x4, fixed_abs, tag = 'smem constant byte address 0x4 - core index']
  #allocation1 [shape = 'u32[144,128]{1,0:T(1,128)}', space=vmem, size = 0x12000, scoped, tag = 'internal scratch']
  %s0 = inlined_call_operand.vmem [shape: f32[14,4], index: 0, kind: input, shape index: {}]
  %s1 = inlined_call_operand.vmem [shape: f32[4,16], index: 1, kind: input, shape index: {}]
  %s2 = inlined_call_operand.vmem [shape: f32[16,16], index: 2, kind: input, shape index: {}]
  %s3 = inlined_call_operand.hbm [shape: f32[16,128], index: 3, kind: input, shape index: {}]
  %s4 = inlined_call_operand.vmem [shape: f32[1,128], index: 4, kind: input, shape index: {}]
  %s5 = inlined_call_operand.hbm [shape: bf16[14,128], index: 5, kind: output, shape index: {}]
  %s6 = sld [smem:[#allocation0]]
  $region34: #{tpu_custom_call.1} parent=0
    _
  %s8 = ssub.s32 1, %s6
  %s9 = scalar_select 0, %s8, %s6
  $region1: #{tpu_custom_call.1} parent=0
    #allocation2 [shape = 'u8[8192]{0}', space=vmem, size = 0x2000, scoped, tag = 'input window, operand 3, single buffered']
    #allocation3 [shape = 's32[1]{0}', space=sflag, size = 0x4, scoped, tag = 'scoped memory for tpu_custom_call.1']
    #allocation4 [shape = 's32[1]{0}', space=sflag, size = 0x4, scoped, tag = 'scoped memory for tpu_custom_call.1']
    #allocation5 [shape = 'u8[4096]{0}', space=vmem, size = 0x1000, scoped, tag = 'output window, operand 0, single buffered']
    %10 = vsyncpa [#allocation3], 0
    %11 = vsyncpa [#allocation4], 0
    // Predicated region
    $region2: #{tpu_custom_call.1} parent=1 // pred_check
      _
    $region3: #{tpu_custom_call.1} parent=1 // pred_check_branch
      %13 = sbr.rel (0) target = $region5
    $region4: #{tpu_custom_call.1} parent=1 // pred_region
      _
    $region5: #{tpu_custom_call.1} parent=1 // pred_fallthru
      _
    // Predicated region
    $region6: #{tpu_custom_call.1} parent=1 // pred_check
      _
    $region7: #{tpu_custom_call.1} parent=1 // pred_check_branch
      %15 = sbr.rel (0) target = $region9
    $region8: #{tpu_custom_call.1} parent=1 // pred_region
      _
    $region9: #{tpu_custom_call.1} parent=1 // pred_fallthru
      _
    // Predicated region
    $region10: #{tpu_custom_call.1} parent=1 // pred_check
      _
    $region11: #{tpu_custom_call.1} parent=1 // pred_check_branch
      %17 = sbr.rel (0) target = $region13
    $region12: #{tpu_custom_call.1} parent=1 // pred_region
      _
    $region13: #{tpu_custom_call.1} parent=1 // pred_fallthru
      _
    // Predicated region
    $region14: #{tpu_custom_call.1} parent=1 // pred_check
      _
    $region15: #{tpu_custom_call.1} parent=1 // pred_check_branch
      %19 = sbr.rel (0) target = $region17
    $region16: #{tpu_custom_call.1} parent=1 // pred_region
      %s21 = ssub.s32 256, 256
      %22 = vsyncadd [#allocation3], %s21
      %s23 = sshll.u32 [#allocation2], 4
      %s24 = int_to_ptr.vmem [resolvable:$true] %s23
      %29 = dma.hbm_to_vmem [thread:$0]  %s3, 256, %s24, [#allocation3], 128, 128, 8
    $region17: #{tpu_custom_call.1} parent=1 // pred_fallthru
      _
    // Predicated region
    $region18: #{tpu_custom_call.1} parent=1 // pred_check
      _
    $region19: #{tpu_custom_call.1} parent=1 // pred_check_branch
      %31 = sbr.rel (0) target = $region21
    $region20: #{tpu_custom_call.1} parent=1 // pred_region
      _
    $region21: #{tpu_custom_call.1} parent=1 // pred_fallthru
      _
    // Predicated region
    $region22: #{tpu_custom_call.1} parent=1 // pred_check
      _
    $region23: #{tpu_custom_call.1} parent=1 // pred_check_branch
      %33 = sbr.rel (0) target = $region25
    $region24: #{tpu_custom_call.1} parent=1 // pred_region
      %34 = dma.done [#allocation3], 256
    $region25: #{tpu_custom_call.1} parent=1 // pred_fallthru
      _
    %v35 = vld [vmem:[%s0] sm:$0xff]
    %v36 = vld [vmem:[%s0 + $0x8] sm:$0x3f]
    %v37 = vld [vmem:[%s1] sm:$0xf]
    %vm38 = vcmask 31744
    %v40 = vsel %vm38, %v35, 0
    %v43 = vsel %vm38, %v36, 0
    %vm45 = vcmask 1043456
    %v47 = vsel %vm45, %v37, 0
    %49 = vmatprep.subr.mxu0 0.0
    %50 = vmatpush1.msra.mxu0 %v47
    %51 = vmatprep.subr.mxu0 0.0
    %52 = vmatpush1.msra.mxu0 0.0
    %53 = vmatprep.subr.mxu0 0.0
    %54 = vmatpush1.msra.mxu0 0.0
    %55 = vmatprep.subr.mxu0 0.0
    %56 = vmatpush1.msra.mxu0 0.0
    %57 = vmatprep.subr.mxu0 0.0
    %58 = vmatpush1.msra.mxu0 0.0
    %59 = vmatprep.subr.mxu0 0.0
    %60 = vmatpush1.msra.mxu0 0.0
    %61 = vmatprep.subr.mxu0 0.0
    %62 = vmatpush1.msra.mxu0 0.0
    %63 = vmatprep.subr.mxu0 0.0
    %64 = vmatpush1.msra.mxu0 0.0
    %65 = vmatprep.subr.mxu0 0.0
    %66 = vmatpush1.msra.mxu0 0.0
    %67 = vmatprep.subr.mxu0 0.0
    %68 = vmatpush1.msra.mxu0 0.0
    %69 = vmatprep.subr.mxu0 0.0
    %70 = vmatpush1.msra.mxu0 0.0
    %71 = vmatprep.subr.mxu0 0.0
    %72 = vmatpush1.msra.mxu0 0.0
    %73 = vmatprep.subr.mxu0 0.0
    %74 = vmatpush1.msra.mxu0 0.0
    %75 = vmatprep.subr.mxu0 0.0
    %76 = vmatpush1.msra.mxu0 0.0
    %77 = vmatprep.subr.mxu0 0.0
    %78 = vmatpush1.msra.mxu0 0.0
    %79 = vmatprep.subr.mxu0 0.0
    %80 = vmatpush1.msra.mxu0 0.0
    %81 = vmatprep.subr.mxu0 0.0
    %82 = vmatpush1.msra.mxu0 0.0
    %83 = vmatprep.subr.mxu0 0.0
    %84 = vmatpush1.msra.mxu0 0.0
    %85 = vmatprep.subr.mxu0 0.0
    %86 = vmatpush1.msra.mxu0 0.0
    %87 = vmatprep.subr.mxu0 0.0
    %88 = vmatpush1.msra.mxu0 0.0
    %89 = vmatprep.subr.mxu0 0.0
    %90 = vmatpush1.msra.mxu0 0.0
    %91 = vmatprep.subr.mxu0 0.0
    %92 = vmatpush1.msra.mxu0 0.0
    %93 = vmatprep.subr.mxu0 0.0
    %94 = vmatpush1.msra.mxu0 0.0
    %95 = vmatprep.subr.mxu0 0.0
    %96 = vmatpush1.msra.mxu0 0.0
    %97 = vmatprep.subr.mxu0 0.0
    %98 = vmatpush1.msra.mxu0 0.0
    %99 = vmatprep.subr.mxu0 0.0
    %100 = vmatpush1.msra.mxu0 0.0
    %101 = vmatprep.subr.mxu0 0.0
    %102 = vmatpush1.msra.mxu0 0.0
    %103 = vmatprep.subr.mxu0 0.0
    %104 = vmatpush1.msra.mxu0 0.0
    %105 = vmatprep.subr.mxu0 0.0
    %106 = vmatpush1.msra.mxu0 0.0
    %107 = vmatprep.subr.mxu0 0.0
    %108 = vmatpush1.msra.mxu0 0.0
    %109 = vmatprep.subr.mxu0 0.0
    %110 = vmatpush1.msra.mxu0 0.0
    %111 = vmatprep.subr.mxu0 0.0
    %112 = vmatpush1.msra.mxu0 0.0
    %113 = vmatprep.mubr.f32.mxu0 0.0
    %114 = vmatmul.mubr.f32.gmra.mrb[0].mxu0 %v40
    %v115 = vpop.f32.mrb[0].mxu0
    %v116 = vadd.f32 0.0, %v115
    %v117 = vpop.f32.mrb[0].mxu0
    %118 = vmatprep.mubr.f32.mxu0 0.0
    %119 = vmatmul.mubr.f32.gmra.mrb[0].mxu0 %v43
    %v120 = vpop.f32.mrb[0].mxu0
    %v121 = vadd.f32 0.0, %v120
    %v122 = vpop.f32.mrb[0].mxu0
    %123 = vdwg.mxu0
    %v124 = vmax.f32 %v116, 0.0
    %v125 = vmax.f32 %v121, 0.0
    %v126 = vld [vmem:[%s2] sm:$0xff]
    %v127 = vld [vmem:[%s2 + $0x8] sm:$0xff]
    %vm128 = vcmask 130048
    %v130 = vsel %vm128, %v124, 0
    %v133 = vsel %vm128, %v125, 0
    %135 = vmatprep.subr.mxu0 0.0
    %136 = vmatpush1.msra.mxu0 %v126
    %137 = vmatprep.subr.mxu0 0.0
    %138 = vmatpush1.msra.mxu0 %v127
    %139 = vmatprep.subr.mxu0 0.0
    %140 = vmatpush1.msra.mxu0 0.0
    %141 = vmatprep.subr.mxu0 0.0
    %142 = vmatpush1.msra.mxu0 0.0
    %143 = vmatprep.subr.mxu0 0.0
    %144 = vmatpush1.msra.mxu0 0.0
    %145 = vmatprep.subr.mxu0 0.0
    %146 = vmatpush1.msra.mxu0 0.0
    %147 = vmatprep.subr.mxu0 0.0
    %148 = vmatpush1.msra.mxu0 0.0
    %149 = vmatprep.subr.mxu0 0.0
    %150 = vmatpush1.msra.mxu0 0.0
    %151 = vmatprep.subr.mxu0 0.0
    %152 = vmatpush1.msra.mxu0 0.0
    %153 = vmatprep.subr.mxu0 0.0
    %154 = vmatpush1.msra.mxu0 0.0
    %155 = vmatprep.subr.mxu0 0.0
    %156 = vmatpush1.msra.mxu0 0.0
    %157 = vmatprep.subr.mxu0 0.0
    %158 = vmatpush1.msra.mxu0 0.0
    %159 = vmatprep.subr.mxu0 0.0
    %160 = vmatpush1.msra.mxu0 0.0
    %161 = vmatprep.subr.mxu0 0.0
    %162 = vmatpush1.msra.mxu0 0.0
    %163 = vmatprep.subr.mxu0 0.0
    %164 = vmatpush1.msra.mxu0 0.0
    %165 = vmatprep.subr.mxu0 0.0
    %166 = vmatpush1.msra.mxu0 0.0
    %167 = vmatprep.subr.mxu0 0.0
    %168 = vmatpush1.msra.mxu0 0.0
    %169 = vmatprep.subr.mxu0 0.0
    %170 = vmatpush1.msra.mxu0 0.0
    %171 = vmatprep.subr.mxu0 0.0
    %172 = vmatpush1.msra.mxu0 0.0
    %173 = vmatprep.subr.mxu0 0.0
    %174 = vmatpush1.msra.mxu0 0.0
    %175 = vmatprep.subr.mxu0 0.0
    %176 = vmatpush1.msra.mxu0 0.0
    %177 = vmatprep.subr.mxu0 0.0
    %178 = vmatpush1.msra.mxu0 0.0
    %179 = vmatprep.subr.mxu0 0.0
    %180 = vmatpush1.msra.mxu0 0.0
    %181 = vmatprep.subr.mxu0 0.0
    %182 = vmatpush1.msra.mxu0 0.0
    %183 = vmatprep.subr.mxu0 0.0
    %184 = vmatpush1.msra.mxu0 0.0
    %185 = vmatprep.subr.mxu0 0.0
    %186 = vmatpush1.msra.mxu0 0.0
    %187 = vmatprep.subr.mxu0 0.0
    %188 = vmatpush1.msra.mxu0 0.0
    %189 = vmatprep.subr.mxu0 0.0
    %190 = vmatpush1.msra.mxu0 0.0
    %191 = vmatprep.subr.mxu0 0.0
    %192 = vmatpush1.msra.mxu0 0.0
    %193 = vmatprep.subr.mxu0 0.0
    %194 = vmatpush1.msra.mxu0 0.0
    %195 = vmatprep.subr.mxu0 0.0
    %196 = vmatpush1.msra.mxu0 0.0
    %197 = vmatprep.subr.mxu0 0.0
    %198 = vmatpush1.msra.mxu0 0.0
    %199 = vmatprep.mubr.f32.mxu0 0.0
    %200 = vmatmul.mubr.f32.gmra.mrb[0].mxu0 %v130
    %v201 = vpop.f32.mrb[0].mxu0
    %v202 = vadd.f32 0.0, %v201
    %v203 = vpop.f32.mrb[0].mxu0
    %204 = vmatprep.mubr.f32.mxu0 0.0
    %205 = vmatmul.mubr.f32.gmra.mrb[0].mxu0 %v133
    %v206 = vpop.f32.mrb[0].mxu0
    %v207 = vadd.f32 0.0, %v206
    %v208 = vpop.f32.mrb[0].mxu0
    %209 = vdwg.mxu0
    %v210 = vmax.f32 %v202, 0.0
    %v211 = vmax.f32 %v207, 0.0
    %v212 = vld [vmem:[#allocation2] sm:$0xff]
    %v213 = vld [vmem:[#allocation2 + $0x8] sm:$0xff]
    %v214 = vld [vmem:[%s4] sm:$0x1]
    %v216 = vlaneseq
    %v217 = vshrl.u32 %v216, 7
    %v218 = vsub.s32 0, %v217
    %v219 = vrot.slane %v214, %v218
    %v222 = vsel %vm128, %v210, 0
    %v225 = vsel %vm128, %v211, 0
    %227 = vmatprep.subr.mxu0 0.0
    %228 = vmatpush1.msra.mxu0 %v212
    %229 = vmatprep.subr.mxu0 0.0
    %230 = vmatpush1.msra.mxu0 %v213
    %231 = vmatprep.subr.mxu0 0.0
    %232 = vmatpush1.msra.mxu0 0.0
    %233 = vmatprep.subr.mxu0 0.0
    %234 = vmatpush1.msra.mxu0 0.0
    %235 = vmatprep.subr.mxu0 0.0
    %236 = vmatpush1.msra.mxu0 0.0
    %237 = vmatprep.subr.mxu0 0.0
    %238 = vmatpush1.msra.mxu0 0.0
    %239 = vmatprep.subr.mxu0 0.0
    %240 = vmatpush1.msra.mxu0 0.0
    %241 = vmatprep.subr.mxu0 0.0
    %242 = vmatpush1.msra.mxu0 0.0
    %243 = vmatprep.subr.mxu0 0.0
    %244 = vmatpush1.msra.mxu0 0.0
    %245 = vmatprep.subr.mxu0 0.0
    %246 = vmatpush1.msra.mxu0 0.0
    %247 = vmatprep.subr.mxu0 0.0
    %248 = vmatpush1.msra.mxu0 0.0
    %249 = vmatprep.subr.mxu0 0.0
    %250 = vmatpush1.msra.mxu0 0.0
    %251 = vmatprep.subr.mxu0 0.0
    %252 = vmatpush1.msra.mxu0 0.0
    %253 = vmatprep.subr.mxu0 0.0
    %254 = vmatpush1.msra.mxu0 0.0
    %255 = vmatprep.subr.mxu0 0.0
    %256 = vmatpush1.msra.mxu0 0.0
    %257 = vmatprep.subr.mxu0 0.0
    %258 = vmatpush1.msra.mxu0 0.0
    %259 = vmatprep.subr.mxu0 0.0
    %260 = vmatpush1.msra.mxu0 0.0
    %261 = vmatprep.subr.mxu0 0.0
    %262 = vmatpush1.msra.mxu0 0.0
    %263 = vmatprep.subr.mxu0 0.0
    %264 = vmatpush1.msra.mxu0 0.0
    %265 = vmatprep.subr.mxu0 0.0
    %266 = vmatpush1.msra.mxu0 0.0
    %267 = vmatprep.subr.mxu0 0.0
    %268 = vmatpush1.msra.mxu0 0.0
    %269 = vmatprep.subr.mxu0 0.0
    %270 = vmatpush1.msra.mxu0 0.0
    %271 = vmatprep.subr.mxu0 0.0
    %272 = vmatpush1.msra.mxu0 0.0
    %273 = vmatprep.subr.mxu0 0.0
    %274 = vmatpush1.msra.mxu0 0.0
    %275 = vmatprep.subr.mxu0 0.0
    %276 = vmatpush1.msra.mxu0 0.0
    %277 = vmatprep.subr.mxu0 0.0
    %278 = vmatpush1.msra.mxu0 0.0
    %279 = vmatprep.subr.mxu0 0.0
    %280 = vmatpush1.msra.mxu0 0.0
    %281 = vmatprep.subr.mxu0 0.0
    %282 = vmatpush1.msra.mxu0 0.0
    %283 = vmatprep.subr.mxu0 0.0
    %284 = vmatpush1.msra.mxu0 0.0
    %285 = vmatprep.subr.mxu0 0.0
    %286 = vmatpush1.msra.mxu0 0.0
    %287 = vmatprep.subr.mxu0 0.0
    %288 = vmatpush1.msra.mxu0 0.0
    %289 = vmatprep.subr.mxu0 0.0
    %290 = vmatpush1.msra.mxu0 0.0
    %291 = vmatprep.mubr.f32.mxu0 0.0
    %292 = vmatmul.mubr.f32.gmra.mrb[0].mxu0 %v222
    %v293 = vpop.f32.mrb[0].mxu0
    %v294 = vadd.f32 %v219, %v293
    %v295 = vpop.f32.mrb[0].mxu0
    %296 = vmatprep.mubr.f32.mxu0 0.0
    %297 = vmatmul.mubr.f32.gmra.mrb[0].mxu0 %v225
    %v298 = vpop.f32.mrb[0].mxu0
    %v299 = vadd.f32 %v219, %v298
    %v300 = vpop.f32.mrb[0].mxu0
    %301 = vdwg.mxu0
    %v302 = vpack.c.bf16 %v299, %v294
    %v304 = vunpack.c.l.b16 %v302
    %v305 = vunpack.c.h.b16 %v302
    %v306 = vpack.c.b16 %v304, %v304
    %v307 = vpack.c.b16 %v305, %v305
    %310 = vst [vmem:[#allocation5] sm:$0xf] %v306
    %311 = vst [vmem:[#allocation5 + $0x4] sm:$0x7] %v307
    // Predicated region
    $region26: #{tpu_custom_call.1} parent=1 // pred_check
      _
    $region27: #{tpu_custom_call.1} parent=1 // pred_check_branch
      %313 = sbr.rel (0) target = $region29
    $region28: #{tpu_custom_call.1} parent=1 // pred_region
      %s315 = ssub.s32 128, 128
      %316 = vsyncadd [#allocation4], %s315
      %s317 = sshll.u32 [#allocation5], 4
      %s318 = int_to_ptr.vmem [resolvable:$true] %s317
      %323 = dma.vmem_to_hbm [thread:$0]  %s318, 128, %s5, [#allocation4], 64, 64, 4
    $region29: #{tpu_custom_call.1} parent=1 // pred_fallthru
      _
    // Predicated region
    $region30: #{tpu_custom_call.1} parent=1 // pred_check
      _
    $region31: #{tpu_custom_call.1} parent=1 // pred_check_branch
      %325 = sbr.rel (0) target = $region33
    $region32: #{tpu_custom_call.1} parent=1 // pred_region
      %326 = dma.done [#allocation4], 128
    $region33: #{tpu_custom_call.1} parent=1 // pred_fallthru
      _
    %327 = vsyncpa [#allocation3], 1
    %328 = vsyncpa [#allocation4], 1

</llo_original>
